<compile_context>
chip_gen: v5e
topology: v5e:2x2
jax: 0.10.0
libtpu: 0.0.40
codegen_flags: <defaults>
</compile_context>

<pallas_src>
import jax
import jax.numpy as jnp
from jax.experimental import pallas as pl
from jax.experimental.pallas import tpu as pltpu

# ----------------------------- config (small, deterministic) -----------------
B = 2          # batch
S = 8          # sequence length
Y_DIM = 6      # target_size (labels feature dim)
E_DIM = 10     # explain_size (explains feature dim)
CAT_DIM = Y_DIM + E_DIM
D_MODEL = 32   # d_model
OBS = 24       # output_shape (non-image producer output feature dim)
N_TOK = B * S  # tokens processed in the single kernel invocation

# Packed-parameter slab layout (rows x 32 cols, 8-row-aligned sections):
#   rows  0:16  -> W_fused  (CAT_DIM, D_MODEL)   = Wj @ W1
#   row  16     -> b_fused  (1, D_MODEL)         = bj @ W1 + b1
#   rows 24:56  -> W2       (D_MODEL, OBS) in cols 0:OBS (rest zero)
#   row  56     -> b2       (1, OBS)       in cols 0:OBS (rest zero)
SLAB_ROWS = 64
ROW_W_FUSED = 0
ROW_B_FUSED = 16
ROW_W2 = 24
ROW_B2 = 56


# ----------------------------- Pallas kernel ----------------------------------
def producer_fused_kernel(cat_ref, p_ref, x_ref):
    """Fused Producer forward: gelu(cat @ W_fused + b_fused) @ W2 + b2.

    cat_ref: (N_TOK, CAT_DIM)  concat(labels, explains) tokens
    p_ref:   (SLAB_ROWS, D_MODEL) packed parameter slab (see layout above)
    x_ref:   (N_TOK, OBS)
    """
    w_fused = p_ref[ROW_W_FUSED:ROW_W_FUSED + CAT_DIM, :]      # (16, 32)
    b_fused = p_ref[ROW_B_FUSED:ROW_B_FUSED + 1, :]            # (1, 32)
    w2 = p_ref[ROW_W2:ROW_W2 + D_MODEL, 0:OBS]                 # (32, 24)
    b2 = p_ref[ROW_B2:ROW_B2 + 1, 0:OBS]                       # (1, 24)

    h = jnp.dot(cat_ref[...], w_fused, preferred_element_type=jnp.float32) + b_fused
    # TODO(synk): PyTorch nn.GELU defaults to the exact erf form; tanh
    # approximation used here (and in the reference below) for safe lowering.
    h = jax.nn.gelu(h, approximate=True)
    x_ref[...] = jnp.dot(h, w2, preferred_element_type=jnp.float32) + b2


# ----------------------------- wrapper -----------------------------------------
def producer_fused(cat2d, param_slab):
    n_tok = cat2d.shape[0]
    return pl.pallas_call(
        producer_fused_kernel,
        out_shape=jax.ShapeDtypeStruct((n_tok, OBS), jnp.float32),
        # Whole-array VMEM operands, no grid: single invocation, no pipeline
        # bookkeeping, no double-buffering.
        in_specs=[
            pl.BlockSpec(memory_space=pltpu.MemorySpace.VMEM),
            pl.BlockSpec(memory_space=pltpu.MemorySpace.VMEM),
        ],
        out_specs=pl.BlockSpec(memory_space=pltpu.MemorySpace.VMEM),
    )(cat2d, param_slab)


@jax.jit
def producer_forward(labels, explains, params, padding_mask=None):
    """Full Producer.forward. labels: (B,S,Y_DIM), explains: (B,S,E_DIM) -> (B,S,OBS).

    Original PyTorch: z = joint(labels, explains); x = flip(net(flip(z))).
    The producer net here is a position-wise MLP, so the flip/unflip pair is
    the identity on ordering and is elided (zero numerical change), and the
    JointLayer is folded into the MLP's first linear layer (no nonlinearity
    in between).
    # TODO(synk): if the producer net becomes sequence-dependent (recurrence
    # or mask consumption), reinstate the FlipTensor ops around the net call
    # and pass the reversed padding_mask through; padding_mask is currently
    # accepted but unused.
    """
    b, s, _ = labels.shape
    cat = jnp.concatenate([labels, explains], axis=-1).reshape(b * s, CAT_DIM)

    # Algebraic fold of JointLayer into first MLP layer (tiny matmuls, fused
    # under jit; exact up to f32 rounding).
    w_fused = params["wj"] @ params["w1"]                     # (16, 32)
    b_fused = params["bj"] @ params["w1"] + params["b1"]      # (1, 32)

    slab = jnp.zeros((SLAB_ROWS, D_MODEL), jnp.float32)
    slab = slab.at[ROW_W_FUSED:ROW_W_FUSED + CAT_DIM, :].set(w_fused)
    slab = slab.at[ROW_B_FUSED:ROW_B_FUSED + 1, :].set(b_fused)
    slab = slab.at[ROW_W2:ROW_W2 + D_MODEL, 0:OBS].set(params["w2"])
    slab = slab.at[ROW_B2:ROW_B2 + 1, 0:OBS].set(params["b2"])

    x2d = producer_fused(cat, slab)
    return x2d.reshape(b, s, OBS)


def init_params(key):
    """Deterministic xavier-ish init (mirrors init_weights applied in __init__)."""
    k1, k2, k3 = jax.random.split(key, 3)

    def xavier(k, shape):
        fan_in, fan_out = shape
        lim = (6.0 / (fan_in + fan_out)) ** 0.5
        return jax.random.uniform(k, shape, jnp.float32, -lim, lim)

    return {
        "wj": xavier(k1, (CAT_DIM, D_MODEL)),
        "bj": jnp.zeros((1, D_MODEL), jnp.float32),
        "w1": xavier(k2, (D_MODEL, D_MODEL)),
        "b1": jnp.zeros((1, D_MODEL), jnp.float32),
        "w2": xavier(k3, (D_MODEL, OBS)),
        "b2": jnp.zeros((1, OBS), jnp.float32),
    }


if __name__ == "__main__":
    key = jax.random.PRNGKey(0)
    kp, kl, ke = jax.random.split(key, 3)
    params = init_params(kp)
    labels = jax.random.normal(kl, (B, S, Y_DIM), jnp.float32)
    explains = jax.random.normal(ke, (B, S, E_DIM), jnp.float32)

    out = producer_forward(labels, explains, params)
    out = jax.block_until_ready(out)

    # pure-JAX reference: follows the original PyTorch pipeline exactly
    # (joint -> flip -> MLP -> flip), without the fold.
    cat = jnp.concatenate([labels, explains], axis=-1).reshape(B * S, CAT_DIM)
    z_ref = (cat @ params["wj"] + params["bj"]).reshape(B, S, D_MODEL)
    z_rev = jnp.flip(z_ref, axis=1).reshape(B * S, D_MODEL)
    h = jax.nn.gelu(z_rev @ params["w1"] + params["b1"], approximate=True)
    x_rev = (h @ params["w2"] + params["b2"]).reshape(B, S, OBS)
    ref = jnp.flip(x_rev, axis=1)

    assert out.shape == (B, S, OBS)
    assert jnp.allclose(out, ref, atol=1e-4, rtol=1e-4)

    print("KERNEL_OK")
</pallas_src>

<mosaic_0001>
module attributes {stable_mosaic.version = 11 : i64} {
  func.func @producer_fused_kernel(%arg0: memref<16x16xf32, #tpu.memory_space<vmem>>, %arg1: memref<64x32xf32, #tpu.memory_space<vmem>>, %arg2: memref<16x24xf32, #tpu.memory_space<vmem>>) attributes {dimension_semantics = [], scalar_prefetch = 0 : i64, scratch_operands = 0 : i64, tpu.core_type = #tpu.core_type<tc>} {
    %c0 = arith.constant 0 : index
    %c0_0 = arith.constant 0 : index
    %0 = vector.load %arg1[%c0, %c0_0] : memref<64x32xf32, #tpu.memory_space<vmem>>, vector<16x32xf32>
    %c16 = arith.constant 16 : index
    %c0_1 = arith.constant 0 : index
    %1 = vector.load %arg1[%c16, %c0_1] : memref<64x32xf32, #tpu.memory_space<vmem>>, vector<1x32xf32>
    %c24 = arith.constant 24 : index
    %c0_2 = arith.constant 0 : index
    %2 = vector.load %arg1[%c24, %c0_2] : memref<64x32xf32, #tpu.memory_space<vmem>>, vector<32x24xf32>
    %c56 = arith.constant 56 : index
    %c0_3 = arith.constant 0 : index
    %3 = vector.load %arg1[%c56, %c0_3] : memref<64x32xf32, #tpu.memory_space<vmem>>, vector<1x24xf32>
    %c0_4 = arith.constant 0 : index
    %c0_5 = arith.constant 0 : index
    %4 = vector.load %arg0[%c0_4, %c0_5] : memref<16x16xf32, #tpu.memory_space<vmem>>, vector<16x16xf32>
    %cst = arith.constant dense<0.000000e+00> : vector<16x32xf32>
    %5 = tpu.matmul %4, %0, %cst {dimension_numbers = #tpu.dot_dimension_numbers<[1], [0], [0], [1], [0, 0, 1, 1], [], []>} : vector<16x16xf32>, vector<16x32xf32>, vector<16x32xf32> -> vector<16x32xf32>
    %6 = vector.broadcast %1 : vector<1x32xf32> to vector<16x32xf32>
    %7 = arith.addf %5, %6 : vector<16x32xf32>
    %8 = arith.mulf %7, %7 : vector<16x32xf32>
    %9 = arith.mulf %7, %8 : vector<16x32xf32>
    %cst_6 = arith.constant 4.471500e-02 : f32
    %10 = vector.broadcast %cst_6 : f32 to vector<16x32xf32>
    %11 = arith.mulf %10, %9 : vector<16x32xf32>
    %12 = arith.addf %7, %11 : vector<16x32xf32>
    %cst_7 = arith.constant 0.797884583 : f32
    %13 = vector.broadcast %cst_7 : f32 to vector<16x32xf32>
    %14 = arith.mulf %13, %12 : vector<16x32xf32>
    %15 = math.tanh %14 : vector<16x32xf32>
    %cst_8 = arith.constant 1.000000e+00 : f32
    %16 = vector.broadcast %cst_8 : f32 to vector<16x32xf32>
    %17 = arith.addf %16, %15 : vector<16x32xf32>
    %cst_9 = arith.constant 5.000000e-01 : f32
    %18 = vector.broadcast %cst_9 : f32 to vector<16x32xf32>
    %19 = arith.mulf %18, %17 : vector<16x32xf32>
    %20 = arith.mulf %7, %19 : vector<16x32xf32>
    %cst_10 = arith.constant dense<0.000000e+00> : vector<16x24xf32>
    %21 = tpu.matmul %20, %2, %cst_10 {dimension_numbers = #tpu.dot_dimension_numbers<[1], [0], [0], [1], [0, 0, 1, 1], [], []>} : vector<16x32xf32>, vector<32x24xf32>, vector<16x24xf32> -> vector<16x24xf32>
    %22 = vector.broadcast %3 : vector<1x24xf32> to vector<16x24xf32>
    %23 = arith.addf %21, %22 : vector<16x24xf32>
    %c0_11 = arith.constant 0 : index
    %c0_12 = arith.constant 0 : index
    %24 = vector.load %arg2[%c0_11, %c0_12] : memref<16x24xf32, #tpu.memory_space<vmem>>, vector<16x24xf32>
    tpu.vector_store %arg2[%c0_11, %c0_12], %23 {strides = array<i32>} : memref<16x24xf32, #tpu.memory_space<vmem>>, vector<16x24xf32>,
    return
  }
}

</mosaic_0001>

<llo_original>
// kernel: producer_forward.1
$region0: #{producer_forward.1}
  #allocation0 [shape = 'u32[]', space=smem, size = 0x4, offset = 0x4, fixed_abs, tag = 'smem constant byte address 0x4 - core index']
  #allocation1 [shape = 'u32[72,128]{1,0:T(1,128)}', space=vmem, size = 0x9000, scoped, tag = 'internal scratch']
  %s0 = inlined_call_operand.vmem [shape: f32[16,16], index: 0, kind: input, shape index: {}]
  %s1 = inlined_call_operand.vmem [shape: f32[64,32], index: 1, kind: input, shape index: {}]
  %s2 = inlined_call_operand.hbm [shape: f32[16,24], index: 2, kind: output, shape index: {}]
  %s3 = sld [smem:[#allocation0]]
  $region18: #{producer_forward.1} parent=0
    _
  %s5 = ssub.s32 1, %s3
  %s6 = scalar_select 0, %s5, %s3
  $region1: #{producer_forward.1} parent=0
    #allocation2 [shape = 'u8[8192]{0}', space=vmem, size = 0x2000, scoped, tag = 'output window, operand 0, single buffered']
    #allocation3 [shape = 's32[1]{0}', space=sflag, size = 0x4, scoped, tag = 'scoped memory for producer_forward.1']
    %7 = vsyncpa [#allocation3], 0
    // Predicated region
    $region2: #{producer_forward.1} parent=1 // pred_check
      _
    $region3: #{producer_forward.1} parent=1 // pred_check_branch
      %9 = sbr.rel (0) target = $region5
    $region4: #{producer_forward.1} parent=1 // pred_region
      _
    $region5: #{producer_forward.1} parent=1 // pred_fallthru
      _
    // Predicated region
    $region6: #{producer_forward.1} parent=1 // pred_check
      _
    $region7: #{producer_forward.1} parent=1 // pred_check_branch
      %11 = sbr.rel (0) target = $region9
    $region8: #{producer_forward.1} parent=1 // pred_region
      _
    $region9: #{producer_forward.1} parent=1 // pred_fallthru
      _
    %v12 = vld [vmem:[%s1] sm:$0xff]
    %v13 = vld [vmem:[%s1 + $0x8] sm:$0xff]
    %v14 = vld [vmem:[%s1 + $0x10] sm:$0x1]
    %v15 = vld [vmem:[%s1 + $0x18] sm:$0xff]
    %v16 = vld [vmem:[%s1 + $0x20] sm:$0xff]
    %v17 = vld [vmem:[%s1 + $0x28] sm:$0xff]
    %v18 = vld [vmem:[%s1 + $0x30] sm:$0xff]
    %v19 = vld [vmem:[%s1 + $0x38] sm:$0x1]
    %v20 = vld [vmem:[%s0] sm:$0xff]
    %v21 = vld [vmem:[%s0 + $0x8] sm:$0xff]
    %v22 = vperm.slane %v14, 0
    %vm23 = vcmask 130048
    %v25 = vsel %vm23, %v20, 0
    %v28 = vsel %vm23, %v21, 0
    %30 = vmatpush.msra.mxu0 0.0
    %31 = vmatpush.msra.mxu0 0.0
    %32 = vmatpush.msra.mxu0 0.0
    %33 = vmatpush.msra.mxu0 0.0
    %34 = vmatpush.msra.mxu0 0.0
    %35 = vmatpush.msra.mxu0 0.0
    %36 = vmatpush.msra.mxu0 0.0
    %37 = vmatpush.msra.mxu0 0.0
    %38 = vmatpush.msra.mxu0 0.0
    %39 = vmatpush.msra.mxu0 0.0
    %40 = vmatpush.msra.mxu0 0.0
    %41 = vmatpush.msra.mxu0 0.0
    %42 = vmatpush.msra.mxu0 0.0
    %43 = vmatpush.msra.mxu0 0.0
    %44 = vmatpush.msra.mxu0 %v13
    %45 = vmatpush.msra.mxu0 %v12
    %46 = vmatmul.f32.gmra.mxu0 %v25
    %v47 = vpop.f32.mrf.mxu0
    %v48 = vadd.f32 %v22, %v47
    %49 = vmatmul.f32.gmra.mxu0 %v28
    %v50 = vpop.f32.mrf.mxu0
    %v51 = vadd.f32 %v22, %v50
    %52 = vdwg.mxu0
    %v53 = vmul.f32 %v48, %v48
    %v54 = vmul.f32 %v51, %v51
    %v55 = vmul.f32 %v48, %v53
    %v56 = vmul.f32 %v51, %v54
    %v57 = vmul.f32 %v55, 0.044715
    %v58 = vmul.f32 %v56, 0.044715
    %v59 = vadd.f32 %v48, %v57
    %v60 = vadd.f32 %v51, %v58
    %v61 = vmul.f32 %v59, 0.7978846
    %v62 = vmul.f32 %v60, 0.7978846
    %v63 = vtanh.pop %v61
    %v64 = vtanh.pop %v62
    %v65 = vadd.f32 %v63, 1.0
    %v66 = vadd.f32 %v64, 1.0
    %v67 = vmul.f32 %v65, 0.5
    %v68 = vmul.f32 %v66, 0.5
    %v69 = vmul.f32 %v48, %v67
    %v70 = vmul.f32 %v51, %v68
    %v71 = vperm.slane %v19, 0
    %vm72 = vcmask 261120
    %v74 = vsel %vm72, %v69, 0
    %v77 = vsel %vm72, %v70, 0
    %79 = vmatpush.msra.mxu0 0.0
    %80 = vmatpush.msra.mxu0 0.0
    %81 = vmatpush.msra.mxu0 0.0
    %82 = vmatpush.msra.mxu0 0.0
    %83 = vmatpush.msra.mxu0 0.0
    %84 = vmatpush.msra.mxu0 0.0
    %85 = vmatpush.msra.mxu0 0.0
    %86 = vmatpush.msra.mxu0 0.0
    %87 = vmatpush.msra.mxu0 0.0
    %88 = vmatpush.msra.mxu0 0.0
    %89 = vmatpush.msra.mxu0 0.0
    %90 = vmatpush.msra.mxu0 0.0
    %91 = vmatpush.msra.mxu0 %v18
    %92 = vmatpush.msra.mxu0 %v17
    %93 = vmatpush.msra.mxu0 %v16
    %94 = vmatpush.msra.mxu0 %v15
    %95 = vmatmul.f32.gmra.mxu0 %v74
    %v96 = vpop.f32.mrf.mxu0
    %v97 = vadd.f32 %v71, %v96
    %98 = vmatmul.f32.gmra.mxu0 %v77
    %v99 = vpop.f32.mrf.mxu0
    %v100 = vadd.f32 %v71, %v99
    %101 = vdwg.mxu0
    %vm102 = vcmask 195584
    %103 = vst.msk [vmem:[#allocation2] sm:$0xff] %vm102, %v97
    %104 = vst.msk [vmem:[#allocation2 + $0x8] sm:$0xff] %vm102, %v100
    // Predicated region
    $region10: #{producer_forward.1} parent=1 // pred_check
      _
    $region11: #{producer_forward.1} parent=1 // pred_check_branch
      %106 = sbr.rel (0) target = $region13
    $region12: #{producer_forward.1} parent=1 // pred_region
      %108 = vsyncadd [#allocation3], 0
      %s109 = sshll.u32 [#allocation2], 4
      %s110 = int_to_ptr.vmem [resolvable:$true] %s109
      %s111 = sshll.u32 %s2, 4
      %s112 = int_to_ptr.hbm [resolvable:$true] %s111
      %117 = dma.vmem_to_hbm [thread:$0]  %s110, 256, %s112, [#allocation3], 128, 128, 8
    $region13: #{producer_forward.1} parent=1 // pred_fallthru
      _
    // Predicated region
    $region14: #{producer_forward.1} parent=1 // pred_check
      _
    $region15: #{producer_forward.1} parent=1 // pred_check_branch
      %119 = sbr.rel (0) target = $region17
    $region16: #{producer_forward.1} parent=1 // pred_region
      %121 = dma.done [#allocation3], 256
    $region17: #{producer_forward.1} parent=1 // pred_fallthru
      _
    %122 = vsyncpa [#allocation3], 1

</llo_original>
